<compile_context>
chip_gen: v5e
topology: v5e:2x2
jax: 0.10.0
libtpu: 0.0.40
codegen_flags: <defaults>
</compile_context>

<pallas_src>
import functools

import jax
import jax.numpy as jnp
from jax.experimental import pallas as pl
from jax.experimental.pallas import tpu as pltpu


def _gru_cell_kernel(x_ref, h_ref, w_ref, b_ref, o_ref):
    h = h_ref[...]                                    # (Bp, Hp) f32
    # Single fused gate matmul: x @ [W_ir.T | W_iz.T]  -> (Bp, 2*Hp), f32 accumulate.
    y = jnp.dot(x_ref[...], w_ref[...],
                preferred_element_type=jnp.float32) + b_ref[...]
    hp = h.shape[-1]                                  # static, multiple of 128
    h_t = y[:, :hp]
    z_t = jax.nn.sigmoid(y[:, hp:])
    # (1 - z) * h + z * h_t  ==  h + z * (h_t - h)   (saves one VPU mul + sub)
    o_ref[...] = h + z_t * (h_t - h)


def _round_up(n, m):
    return (n + m - 1) // m * m


def _pad2(a, rows, cols):
    return jnp.pad(a, ((0, rows - a.shape[0]), (0, cols - a.shape[1])))


@functools.partial(jax.jit, static_argnames=("compute_dtype",))
def gru_cell_simpler(x, hidden, w_ir, b_ir, w_iz, b_iz, *, compute_dtype=jnp.float32):
    B, H = x.shape
    assert hidden.shape == (B, H)
    assert w_ir.shape == (H, H) and w_iz.shape == (H, H)

    Bp = _round_up(B, 8)      # sublane-aligned batch
    Hp = _round_up(H, 128)    # lane-dense hidden dim

    # Pre-transpose + fuse gate weights: columns [0:Hp) = W_ir.T, [Hp:2Hp) = W_iz.T.
    w_cat = jnp.concatenate(
        [_pad2(w_ir.T, Hp, Hp), _pad2(w_iz.T, Hp, Hp)], axis=1
    ).astype(compute_dtype)                                    # (Hp, 2*Hp)
    b_cat = jnp.concatenate(
        [jnp.pad(b_ir, (0, Hp - H)), jnp.pad(b_iz, (0, Hp - H))]
    ).reshape(1, 2 * Hp).astype(jnp.float32)                   # (1, 2*Hp)

    x_p = _pad2(x, Bp, Hp).astype(compute_dtype)               # (Bp, Hp)
    h_p = _pad2(hidden, Bp, Hp).astype(jnp.float32)            # (Bp, Hp) f32 epilogue

    out = pl.pallas_call(
        _gru_cell_kernel,
        out_shape=jax.ShapeDtypeStruct((Bp, Hp), jnp.float32),
        in_specs=[pl.BlockSpec(memory_space=pltpu.MemorySpace.VMEM)] * 4,
        out_specs=pl.BlockSpec(memory_space=pltpu.MemorySpace.VMEM),
    )(x_p, h_p, w_cat, b_cat)

    return out[:B, :H]


def init_params(key, hidden_size):
    """Deterministic init matching the module: xavier_normal_(gain=relu gain) weights, ones biases."""
    k_ir, k_iz = jax.random.split(key)
    gain = jnp.sqrt(2.0)                                 # nn.init.calculate_gain('relu')
    std = gain * jnp.sqrt(2.0 / (hidden_size + hidden_size))
    w_ir = std * jax.random.normal(k_ir, (hidden_size, hidden_size), jnp.float32)
    w_iz = std * jax.random.normal(k_iz, (hidden_size, hidden_size), jnp.float32)
    b_ir = jnp.ones((hidden_size,), jnp.float32)
    b_iz = jnp.ones((hidden_size,), jnp.float32)
    return w_ir, b_ir, w_iz, b_iz


def _reference(x, hidden, w_ir, b_ir, w_iz, b_iz):
    h_t = x @ w_ir.T + b_ir
    z_t = jax.nn.sigmoid(x @ w_iz.T + b_iz)
    return (1.0 - z_t) * hidden + z_t * h_t


if __name__ == "__main__":
    key = jax.random.PRNGKey(0)
    k_params, k_x, k_h = jax.random.split(key, 3)

    batch = 8
    hidden_size = 32

    w_ir, b_ir, w_iz, b_iz = init_params(k_params, hidden_size)
    x = jax.random.normal(k_x, (batch, hidden_size), jnp.float32)
    hidden = jax.random.normal(k_h, (batch, hidden_size), jnp.float32)

    ref = _reference(x, hidden, w_ir, b_ir, w_iz, b_iz)

    # f32 matmul operands: tight check against the PyTorch-semantics reference.
    out_f32 = gru_cell_simpler(x, hidden, w_ir, b_ir, w_iz, b_iz,
                               compute_dtype=jnp.float32)
    out_f32 = jax.block_until_ready(out_f32)
    assert out_f32.shape == (batch, hidden_size)
    assert jnp.allclose(out_f32, ref, atol=1e-5, rtol=1e-5), "f32 mismatch vs reference"

    # bf16 matmul operands (v6e/v7x fast path), f32 accumulate + f32 epilogue: loose check.
    out_bf16 = gru_cell_simpler(x, hidden, w_ir, b_ir, w_iz, b_iz,
                                compute_dtype=jnp.bfloat16)
    out_bf16 = jax.block_until_ready(out_bf16)
    assert out_bf16.shape == (batch, hidden_size)
    assert jnp.allclose(out_bf16, ref, atol=1e-1, rtol=1e-1), "bf16 mismatch vs reference"

    print("KERNEL_OK")
</pallas_src>

<mosaic_0001>
module attributes {stable_mosaic.version = 11 : i64} {
  func.func @_gru_cell_kernel(%arg0: memref<8x128xf32, #tpu.memory_space<vmem>>, %arg1: memref<8x128xf32, #tpu.memory_space<vmem>>, %arg2: memref<128x256xf32, #tpu.memory_space<vmem>>, %arg3: memref<1x256xf32, #tpu.memory_space<vmem>>, %arg4: memref<8x128xf32, #tpu.memory_space<vmem>>) attributes {dimension_semantics = [], scalar_prefetch = 0 : i64, scratch_operands = 0 : i64, tpu.core_type = #tpu.core_type<tc>} {
    %c0 = arith.constant 0 : index
    %c0_0 = arith.constant 0 : index
    %0 = vector.load %arg1[%c0, %c0_0] : memref<8x128xf32, #tpu.memory_space<vmem>>, vector<8x128xf32>
    %c0_1 = arith.constant 0 : index
    %c0_2 = arith.constant 0 : index
    %1 = vector.load %arg0[%c0_1, %c0_2] : memref<8x128xf32, #tpu.memory_space<vmem>>, vector<8x128xf32>
    %c0_3 = arith.constant 0 : index
    %c0_4 = arith.constant 0 : index
    %2 = vector.load %arg2[%c0_3, %c0_4] : memref<128x256xf32, #tpu.memory_space<vmem>>, vector<128x256xf32>
    %cst = arith.constant dense<0.000000e+00> : vector<8x256xf32>
    %3 = tpu.matmul %1, %2, %cst {dimension_numbers = #tpu.dot_dimension_numbers<[1], [0], [0], [1], [0, 0, 1, 1], [], []>} : vector<8x128xf32>, vector<128x256xf32>, vector<8x256xf32> -> vector<8x256xf32>
    %c0_5 = arith.constant 0 : index
    %c0_6 = arith.constant 0 : index
    %4 = vector.load %arg3[%c0_5, %c0_6] : memref<1x256xf32, #tpu.memory_space<vmem>>, vector<1x256xf32>
    %5 = vector.broadcast %4 : vector<1x256xf32> to vector<8x256xf32>
    %6 = arith.addf %3, %5 : vector<8x256xf32>
    %7 = vector.extract_strided_slice %6 {offsets = [0, 0], sizes = [8, 128], strides = [1, 1]} : vector<8x256xf32> to vector<8x128xf32>
    %8 = vector.extract_strided_slice %6 {offsets = [0, 128], sizes = [8, 128], strides = [1, 1]} : vector<8x256xf32> to vector<8x128xf32>
    %9 = arith.negf %8 : vector<8x128xf32>
    %10 = math.exp %9 : vector<8x128xf32>
    %cst_7 = arith.constant 1.000000e+00 : f32
    %11 = vector.broadcast %cst_7 : f32 to vector<8x128xf32>
    %12 = arith.addf %11, %10 : vector<8x128xf32>
    %13 = arith.divf %11, %12 : vector<8x128xf32>
    %14 = arith.subf %7, %0 : vector<8x128xf32>
    %15 = arith.mulf %13, %14 : vector<8x128xf32>
    %16 = arith.addf %0, %15 : vector<8x128xf32>
    %c0_8 = arith.constant 0 : index
    %c0_9 = arith.constant 0 : index
    %17 = vector.load %arg4[%c0_8, %c0_9] : memref<8x128xf32, #tpu.memory_space<vmem>>, vector<8x128xf32>
    tpu.vector_store %arg4[%c0_8, %c0_9], %16 {strides = array<i32>} : memref<8x128xf32, #tpu.memory_space<vmem>>, vector<8x128xf32>,
    return
  }
}

</mosaic_0001>

<llo_original>
// kernel: gru_cell_simpler.1
$region0: #{gru_cell_simpler.1}
  #allocation0 [shape = 'u32[]', space=smem, size = 0x4, offset = 0x4, fixed_abs, tag = 'smem constant byte address 0x4 - core index']
  #allocation1 [shape = 'u32[72,128]{1,0:T(1,128)}', space=vmem, size = 0x9000, scoped, tag = 'internal scratch']
  %s0 = inlined_call_operand.vmem [shape: f32[8,128], index: 0, kind: input, shape index: {}]
  %s1 = inlined_call_operand.vmem [shape: f32[8,128], index: 1, kind: input, shape index: {}]
  %s2 = inlined_call_operand.vmem [shape: f32[128,256], index: 2, kind: input, shape index: {}]
  %s3 = inlined_call_operand.vmem [shape: f32[1,256], index: 3, kind: input, shape index: {}]
  %s4 = inlined_call_operand.hbm [shape: f32[8,128], index: 4, kind: output, shape index: {}]
  %s5 = sld [smem:[#allocation0]]
  $region26: #{gru_cell_simpler.1} parent=0
    _
  %s7 = ssub.s32 1, %s5
  %s8 = scalar_select 0, %s7, %s5
  $region1: #{gru_cell_simpler.1} parent=0
    #allocation2 [shape = 'u8[4096]{0}', space=vmem, size = 0x1000, scoped, tag = 'output window, operand 0, single buffered']
    #allocation3 [shape = 's32[1]{0}', space=sflag, size = 0x4, scoped, tag = 'scoped memory for gru_cell_simpler.1']
    %9 = vsyncpa [#allocation3], 0
    // Predicated region
    $region2: #{gru_cell_simpler.1} parent=1 // pred_check
      _
    $region3: #{gru_cell_simpler.1} parent=1 // pred_check_branch
      %11 = sbr.rel (0) target = $region5
    $region4: #{gru_cell_simpler.1} parent=1 // pred_region
      _
    $region5: #{gru_cell_simpler.1} parent=1 // pred_fallthru
      _
    // Predicated region
    $region6: #{gru_cell_simpler.1} parent=1 // pred_check
      _
    $region7: #{gru_cell_simpler.1} parent=1 // pred_check_branch
      %13 = sbr.rel (0) target = $region9
    $region8: #{gru_cell_simpler.1} parent=1 // pred_region
      _
    $region9: #{gru_cell_simpler.1} parent=1 // pred_fallthru
      _
    // Predicated region
    $region10: #{gru_cell_simpler.1} parent=1 // pred_check
      _
    $region11: #{gru_cell_simpler.1} parent=1 // pred_check_branch
      %15 = sbr.rel (0) target = $region13
    $region12: #{gru_cell_simpler.1} parent=1 // pred_region
      _
    $region13: #{gru_cell_simpler.1} parent=1 // pred_fallthru
      _
    // Predicated region
    $region14: #{gru_cell_simpler.1} parent=1 // pred_check
      _
    $region15: #{gru_cell_simpler.1} parent=1 // pred_check_branch
      %17 = sbr.rel (0) target = $region17
    $region16: #{gru_cell_simpler.1} parent=1 // pred_region
      _
    $region17: #{gru_cell_simpler.1} parent=1 // pred_fallthru
      _
    %v18 = vld [vmem:[%s1] sm:$0xff]
    %v19 = vld [vmem:[%s0] sm:$0xff]
    %v20 = vld [vmem:[%s2] sm:$0xff]
    %v21 = vld [vmem:[%s2 + $0x8] sm:$0xff]
    %v22 = vld [vmem:[%s2 + $0x10] sm:$0xff]
    %v23 = vld [vmem:[%s2 + $0x18] sm:$0xff]
    %v24 = vld [vmem:[%s2 + $0x20] sm:$0xff]
    %v25 = vld [vmem:[%s2 + $0x28] sm:$0xff]
    %v26 = vld [vmem:[%s2 + $0x30] sm:$0xff]
    %v27 = vld [vmem:[%s2 + $0x38] sm:$0xff]
    %v28 = vld [vmem:[%s2 + $0x40] sm:$0xff]
    %v29 = vld [vmem:[%s2 + $0x48] sm:$0xff]
    %v30 = vld [vmem:[%s2 + $0x50] sm:$0xff]
    %v31 = vld [vmem:[%s2 + $0x58] sm:$0xff]
    %v32 = vld [vmem:[%s2 + $0x60] sm:$0xff]
    %v33 = vld [vmem:[%s2 + $0x68] sm:$0xff]
    %v34 = vld [vmem:[%s2 + $0x70] sm:$0xff]
    %v35 = vld [vmem:[%s2 + $0x78] sm:$0xff]
    %v36 = vld [vmem:[%s2 + $0x80] sm:$0xff]
    %v37 = vld [vmem:[%s2 + $0x88] sm:$0xff]
    %v38 = vld [vmem:[%s2 + $0x90] sm:$0xff]
    %v39 = vld [vmem:[%s2 + $0x98] sm:$0xff]
    %v40 = vld [vmem:[%s2 + $0xa0] sm:$0xff]
    %v41 = vld [vmem:[%s2 + $0xa8] sm:$0xff]
    %v42 = vld [vmem:[%s2 + $0xb0] sm:$0xff]
    %v43 = vld [vmem:[%s2 + $0xb8] sm:$0xff]
    %v44 = vld [vmem:[%s2 + $0xc0] sm:$0xff]
    %v45 = vld [vmem:[%s2 + $0xc8] sm:$0xff]
    %v46 = vld [vmem:[%s2 + $0xd0] sm:$0xff]
    %v47 = vld [vmem:[%s2 + $0xd8] sm:$0xff]
    %v48 = vld [vmem:[%s2 + $0xe0] sm:$0xff]
    %v49 = vld [vmem:[%s2 + $0xe8] sm:$0xff]
    %v50 = vld [vmem:[%s2 + $0xf0] sm:$0xff]
    %v51 = vld [vmem:[%s2 + $0xf8] sm:$0xff]
    %v52 = vld [vmem:[%s3] sm:$0x3]
    %v54 = vperm.slane %v52, 0
    %v55 = vperm.slane %v52, 1
    %58 = vmatpush.msra.mxu0 %v50
    %59 = vmatpush.msra.mxu0 %v48
    %60 = vmatpush.msra.mxu0 %v46
    %61 = vmatpush.msra.mxu0 %v44
    %62 = vmatpush.msra.mxu0 %v42
    %63 = vmatpush.msra.mxu0 %v40
    %64 = vmatpush.msra.mxu0 %v38
    %65 = vmatpush.msra.mxu0 %v36
    %66 = vmatpush.msra.mxu0 %v34
    %67 = vmatpush.msra.mxu0 %v32
    %68 = vmatpush.msra.mxu0 %v30
    %69 = vmatpush.msra.mxu0 %v28
    %70 = vmatpush.msra.mxu0 %v26
    %71 = vmatpush.msra.mxu0 %v24
    %72 = vmatpush.msra.mxu0 %v22
    %73 = vmatpush.msra.mxu0 %v20
    %74 = vmatmul.f32.gmra.mxu0 %v19
    %v75 = vpop.f32.mrf.mxu0
    %v76 = vadd.f32 %v54, %v75
    %77 = vdwg.mxu0
    %78 = vmatpush.msra.mxu0 %v51
    %79 = vmatpush.msra.mxu0 %v49
    %80 = vmatpush.msra.mxu0 %v47
    %81 = vmatpush.msra.mxu0 %v45
    %82 = vmatpush.msra.mxu0 %v43
    %83 = vmatpush.msra.mxu0 %v41
    %84 = vmatpush.msra.mxu0 %v39
    %85 = vmatpush.msra.mxu0 %v37
    %86 = vmatpush.msra.mxu0 %v35
    %87 = vmatpush.msra.mxu0 %v33
    %88 = vmatpush.msra.mxu0 %v31
    %89 = vmatpush.msra.mxu0 %v29
    %90 = vmatpush.msra.mxu0 %v27
    %91 = vmatpush.msra.mxu0 %v25
    %92 = vmatpush.msra.mxu0 %v23
    %93 = vmatpush.msra.mxu0 %v21
    %94 = vmatmul.f32.gmra.mxu0 %v19
    %v95 = vpop.f32.mrf.mxu0
    %v96 = vadd.f32 %v55, %v95
    %97 = vdwg.mxu0
    %v98 = vxor.u32 %v96, 2147483648
    %v99 = vmul.f32 %v98, 1.442695
    %v100 = vpow.pop %v99
    %v101 = vadd.f32 %v100, 1.0
    %v102 = vrcp.pop %v101
    %v103 = vmul.f32 %v101, %v102
    %v104 = vsub.f32 1.0, %v103
    %v105 = vmul.f32 %v102, %v104
    %v106 = vadd.f32 %v102, %v105
    %vm107 = vweird.f32 %v101
    %vm108 = vweird.f32 %v102
    %vm109 = vmor %vm107, %vm108
    %v110 = vsel %vm109, %v102, %v106
    %v111 = vand.u32 2147483647, %v101
    %vm112 = vcmp.eq.f32.partialorder %v111, 8.507059e+37
    %v113 = vand.u32 %v101, 2147483648
    %v114 = vor.u32 1.1754944e-38, %v113
    %v115 = vsel %vm112, %v114, %v110
    %v116 = vmul.f32 1.0, %v115
    %v117 = vsub.f32 %v76, %v18
    %v118 = vmul.f32 %v116, %v117
    %v119 = vadd.f32 %v18, %v118
    %120 = vst [vmem:[#allocation2] sm:$0xff] %v119
    // Predicated region
    $region18: #{gru_cell_simpler.1} parent=1 // pred_check
      _
    $region19: #{gru_cell_simpler.1} parent=1 // pred_check_branch
      %122 = sbr.rel (0) target = $region21
    $region20: #{gru_cell_simpler.1} parent=1 // pred_region
      %124 = vsyncadd [#allocation3], 0
      %s126 = sshll.u32 [#allocation2], 4
      %s127 = int_to_ptr.vmem [resolvable:$true] %s126
      %s128 = sshll.u32 %s4, 4
      %s129 = int_to_ptr.hbm [resolvable:$true] %s128
      %131 = dma.vmem_to_hbm [thread:$0]  %s127, 128, %s129, [#allocation3]
    $region21: #{gru_cell_simpler.1} parent=1 // pred_fallthru
      _
    // Predicated region
    $region22: #{gru_cell_simpler.1} parent=1 // pred_check
      _
    $region23: #{gru_cell_simpler.1} parent=1 // pred_check_branch
      %133 = sbr.rel (0) target = $region25
    $region24: #{gru_cell_simpler.1} parent=1 // pred_region
      %135 = dma.done [#allocation3], 128
    $region25: #{gru_cell_simpler.1} parent=1 // pred_fallthru
      _
    %136 = vsyncpa [#allocation3], 1

</llo_original>
